<compile_context>
chip_gen: v6e
topology: v6e:2x2x1
jax: 0.10.0
libtpu: 0.0.40
codegen_flags: <defaults>
</compile_context>

<pallas_src>
import jax
import jax.numpy as jnp
from jax import lax
from jax.experimental import pallas as pl
from jax.experimental.pallas import tpu as pltpu


def _exp_val_kernel(x_ref, m_ref, b_ref, o_ref):
    # x_ref: (tb, 16) float32   -- batch tile in native layout
    # m_ref: (2, 16)  float32   -- masks pre-scaled by 0.5 * weights (resident)
    # b_ref: (2, 1)   float32   -- bias = 0.5 * weights (resident)
    # o_ref: (2, tb)  float32   -- lane-dense output tile
    o_ref[...] = (
        lax.dot_general(
            m_ref[...],
            x_ref[...],
            dimension_numbers=(((1,), (1,)), ((), ())),  # contract the 16-dim
            preferred_element_type=jnp.float32,
        )
        + b_ref[...]
    )


def exp_val_layer_forward(
    x,
    weights,
    mask_zz_12,
    mask_zz_34,
    *,
    block_b=2048,
    small_batch_threshold=4096,
    force_pallas=False,
):
    """Equivalent of exp_val_layer.forward.

    x: (16,) or (B, 16) float32
    weights: (2,) float32 (trainable)
    mask_zz_12, mask_zz_34: (16,) float32 (fixed +/-1 masks)
    Returns (2,) or (B, 2) float32: weights * ((masked_sums + 1) / 2)
    """
    squeeze = x.ndim == 1
    if squeeze:
        x = x[None, :]
    x = x.astype(jnp.float32)
    B, D = x.shape  # D == 16

    # Fold the affine epilogue into the constants:
    #   w * ((m . x + 1) / 2)  ==  (0.5 * w * m) . x  +  0.5 * w
    half_w = 0.5 * weights.astype(jnp.float32)                               # (2,)
    masks = jnp.stack([mask_zz_12, mask_zz_34], axis=0).astype(jnp.float32)  # (2, 16)
    masks_scaled = masks * half_w[:, None]                                   # (2, 16)

    # --- Small/medium batch: plain jnp, fused by XLA. This is the module's
    # --- real regime (single states in the RL loop, batch_size = 64).
    if not force_pallas and B <= small_batch_threshold:
        out = x @ masks_scaled.T + half_w                                    # (B, 2)
        return out[0] if squeeze else out

    # --- Large batch: streamed Pallas kernel. x stays in native (B, 16)
    # --- layout; the 16-wide contraction happens in-kernel on the MXU.
    bias = half_w[:, None]                                                   # (2, 1)

    # Batch tile: always a multiple of 128 lanes (robust to odd block_b).
    block_b = max(128, (block_b // 128) * 128)
    tb = min(block_b, pl.cdiv(B, 128) * 128)
    # v7x: keep >=2 grid steps so ("parallel",) can use both TensorCores,
    # without shrinking tiles below ~1024 rows per step.
    if pl.cdiv(B, tb) < 2 and tb >= 2048:
        tb = max(1024, pl.cdiv(pl.cdiv(B, 2), 128) * 128)

    grid_n = pl.cdiv(B, tb)  # ragged last tile handled by partial-block masking

    outT = pl.pallas_call(
        _exp_val_kernel,
        out_shape=jax.ShapeDtypeStruct((2, B), jnp.float32),
        grid=(grid_n,),
        in_specs=[
            pl.BlockSpec((tb, D), lambda i: (i, 0)),   # streamed batch tiles
            pl.BlockSpec((2, D), lambda i: (0, 0)),    # resident constants
            pl.BlockSpec((2, 1), lambda i: (0, 0)),    # resident bias
        ],
        out_specs=pl.BlockSpec((2, tb), lambda i: (0, i)),  # lane-dense stores
        compiler_params=pltpu.CompilerParams(
            dimension_semantics=("parallel",),
        ),
    )(x, masks_scaled, bias)

    # Output is 8x smaller than the input stream; this transpose is cheap.
    out = outT.T  # (B, 2)
    return out[0] if squeeze else out


def _reference(x, weights, m12, m34):
    if x.ndim == 1:
        out = jnp.stack([jnp.sum(m12 * x), jnp.sum(m34 * x)])
    else:
        out = jnp.stack([jnp.sum(m12 * x, axis=1), jnp.sum(m34 * x, axis=1)], axis=1)
    return weights * ((out + 1.0) / 2.0)


if __name__ == "__main__":
    key = jax.random.PRNGKey(0)
    k_w, k_x, k_x2 = jax.random.split(key, 3)

    # Deterministic parameter init (init_strategy='uniform': U(-1, 1), shape (2,))
    weights = jax.random.uniform(k_w, (2,), minval=-1.0, maxval=1.0, dtype=jnp.float32)

    mask_zz_12 = jnp.array(
        [1.0, -1.0, -1.0, 1.0, 1.0, -1.0, -1.0, 1.0,
         1.0, -1.0, -1.0, 1.0, 1.0, -1.0, -1.0, 1.0], dtype=jnp.float32)
    mask_zz_34 = jnp.array(
        [-1.0, -1.0, -1.0, -1.0, 1.0, 1.0, 1.0, 1.0,
         -1.0, -1.0, -1.0, -1.0, 1.0, 1.0, 1.0, 1.0], dtype=jnp.float32)

    # 1) Module-sized batch (args.batch_size = 64, 16 probabilities) -> fused jnp path.
    B = 64
    x = jax.random.uniform(k_x, (B, 16), minval=0.0, maxval=1.0, dtype=jnp.float32)
    out = jax.block_until_ready(exp_val_layer_forward(x, weights, mask_zz_12, mask_zz_34))
    ref = _reference(x, weights, mask_zz_12, mask_zz_34)
    assert out.shape == (B, 2), f"bad shape {out.shape}"
    assert jnp.allclose(out, ref, atol=1e-5), "mismatch vs reference (batched, fused path)"

    # 2) Single-state path (shape (16,) -> (2,)).
    x1d = x[0]
    out1d = jax.block_until_ready(
        exp_val_layer_forward(x1d, weights, mask_zz_12, mask_zz_34))
    ref1d = _reference(x1d, weights, mask_zz_12, mask_zz_34)
    assert out1d.shape == (2,) and jnp.allclose(out1d, ref1d, atol=1e-5), \
        "mismatch vs reference (1-D)"

    # 3) Pallas path: small-shape exercise of the streamed kernel with a
    #    multi-step grid and a ragged last tile (B=300, tb clamped to 128).
    B2 = 300
    x2 = jax.random.uniform(k_x2, (B2, 16), minval=0.0, maxval=1.0, dtype=jnp.float32)
    out2 = jax.block_until_ready(
        exp_val_layer_forward(x2, weights, mask_zz_12, mask_zz_34,
                              block_b=200, force_pallas=True))
    ref2 = _reference(x2, weights, mask_zz_12, mask_zz_34)
    assert out2.shape == (B2, 2), f"bad shape {out2.shape}"
    assert jnp.allclose(out2, ref2, atol=1e-5), "mismatch vs reference (Pallas path)"

    print("KERNEL_OK")
</pallas_src>

<mosaic_0001>
module attributes {stable_mosaic.version = 11 : i64} {
  func.func @_exp_val_kernel(%arg0: i32, %arg1: memref<128x16xf32, #tpu.memory_space<vmem>>, %arg2: memref<2x16xf32, #tpu.memory_space<vmem>>, %arg3: memref<2x1xf32, #tpu.memory_space<vmem>>, %arg4: memref<2x128xf32, #tpu.memory_space<vmem>>) attributes {dimension_semantics = [#tpu.dimension_semantics<parallel>], iteration_bounds = array<i64: 3>, scalar_prefetch = 0 : i64, scratch_operands = 0 : i64, tpu.core_type = #tpu.core_type<tc>, window_params = [{transform_indices = @transform_0, window_bounds = array<i64: 128, 16>}, {pipeline_mode = #tpu.pipeline_mode<synchronous>, transform_indices = @transform_1, window_bounds = array<i64: 2, 16>}, {pipeline_mode = #tpu.pipeline_mode<synchronous>, transform_indices = @transform_2, window_bounds = array<i64: 2, 1>}, {transform_indices = @transform_3, window_bounds = array<i64: 2, 128>}]} {
    %c0 = arith.constant 0 : index
    %c0_0 = arith.constant 0 : index
    %0 = vector.load %arg2[%c0, %c0_0] : memref<2x16xf32, #tpu.memory_space<vmem>>, vector<2x16xf32>
    %c0_1 = arith.constant 0 : index
    %c0_2 = arith.constant 0 : index
    %1 = vector.load %arg1[%c0_1, %c0_2] : memref<128x16xf32, #tpu.memory_space<vmem>>, vector<128x16xf32>
    %cst = arith.constant dense<0.000000e+00> : vector<2x128xf32>
    %2 = tpu.matmul %0, %1, %cst {dimension_numbers = #tpu.dot_dimension_numbers<[1], [1], [0], [0], [0, 0, 1, 0], [], []>} : vector<2x16xf32>, vector<128x16xf32>, vector<2x128xf32> -> vector<2x128xf32>
    %c0_3 = arith.constant 0 : index
    %c0_4 = arith.constant 0 : index
    %3 = vector.load %arg3[%c0_3, %c0_4] : memref<2x1xf32, #tpu.memory_space<vmem>>, vector<2x1xf32>
    %4 = vector.broadcast %3 : vector<2x1xf32> to vector<2x128xf32>
    %5 = arith.addf %2, %4 : vector<2x128xf32>
    %c0_5 = arith.constant 0 : index
    %c0_6 = arith.constant 0 : index
    %6 = vector.load %arg4[%c0_5, %c0_6] : memref<2x128xf32, #tpu.memory_space<vmem>>, vector<2x128xf32>
    tpu.vector_store %arg4[%c0_5, %c0_6], %5 {strides = array<i32>} : memref<2x128xf32, #tpu.memory_space<vmem>>, vector<2x128xf32>,
    return
  }
  func.func @transform_0(%arg0: i32) -> (i32, i32) {
    %c0_i32 = arith.constant 0 : i32
    %c0_i32_0 = arith.constant 0 : i32
    return %arg0, %c0_i32 : i32, i32
  }
  func.func @transform_1(%arg0: i32) -> (i32, i32) {
    %c0_i32 = arith.constant 0 : i32
    %c0_i32_0 = arith.constant 0 : i32
    %c0_i32_1 = arith.constant 0 : i32
    return %c0_i32, %c0_i32_0 : i32, i32
  }
  func.func @transform_2(%arg0: i32) -> (i32, i32) {
    %c0_i32 = arith.constant 0 : i32
    %c0_i32_0 = arith.constant 0 : i32
    %c0_i32_1 = arith.constant 0 : i32
    return %c0_i32, %c0_i32_0 : i32, i32
  }
  func.func @transform_3(%arg0: i32) -> (i32, i32) {
    %c0_i32 = arith.constant 0 : i32
    %c0_i32_0 = arith.constant 0 : i32
    return %c0_i32, %arg0 : i32, i32
  }
}

</mosaic_0001>

<llo_original>
// kernel: tpu_custom_call.1
$region0: #{tpu_custom_call.1}
  #allocation0 [shape = 'u32[]', space=smem, size = 0x4, offset = 0x4, fixed_abs, tag = 'smem constant byte address 0x4 - core index']
  #allocation1 [shape = 'u32[144,128]{1,0:T(1,128)}', space=vmem, size = 0x12000, scoped, tag = 'internal scratch']
  %s0 = inlined_call_operand.vmem [shape: f32[300,16], index: 0, kind: input, shape index: {}]
  %s1 = inlined_call_operand.vmem [shape: f32[2,16], index: 1, kind: input, shape index: {}]
  %s2 = inlined_call_operand.vmem [shape: f32[2,1], index: 2, kind: input, shape index: {}]
  %s3 = inlined_call_operand.hbm [shape: f32[2,300], index: 3, kind: output, shape index: {}]
  %s4 = sld [smem:[#allocation0]]
  $region45: #{tpu_custom_call.1} parent=0
    _
  %s6 = ssub.s32 1, %s4
  %s7 = scalar_select 0, %s6, %s4
  $region1: #{tpu_custom_call.1} parent=0
    #allocation2 [shape = 'u8[2048]{0}', space=vmem, size = 0x800, scoped, tag = 'output window, operand 0']
    #allocation3 [shape = 's32[2]{0}', space=sflag, size = 0x8, scoped, tag = 'scoped memory for tpu_custom_call.1']
    %8 = vsyncpa [#allocation3], 0
    %s9 = scalar_lea.sflag [#allocation3], 1
    %10 = vsyncpa %s9, 0
    loop: start=0, step=1, limit=5
    $region2: #{tpu_custom_call.1} parent=1 // loop_pre_header
      _
    $region3: #{tpu_custom_call.1} parent=1 // loop_header
      %s12 = sphi 0, %s16
      %p13 = scmp.ge.s32.totalorder %s12, 5
      %s22 = sphi 0, %s24
      %s25 = sphi 0, %s22
      %s26 = sphi 0, %s25
      %s42 = sphi 0, %s26
      %s46 = sphi 0, %s46
      %s48 = sphi 0, %s46
      %s49 = sphi 0, %s48
      %s63 = sphi 0, %s49
      %s67 = sphi 0, %s67
      %s69 = sphi 0, %s67
      %s70 = sphi 0, %s69
      %s84 = sphi 0, %s70
      %s90 = sphi 0, %s92
      %s93 = sphi 0, %s90
      %s94 = sphi 0, %s93
      %s110 = sphi 0, %s94
    $region4: #{tpu_custom_call.1} parent=1 // loop_header_branch
      %15 = sbr.rel (%p13) target = $region8
    $region5: #{tpu_custom_call.1} parent=1 // loop_body
      %s17 = ssub.s32 %s12, 1
      %s18 = ssub.s32 %s12, 2
      %s19 = sadd.s32 %s12, 1
      %s20 = ssub.s32 %s12, %s19
      %p21 = scmp.eq.s32.totalorder %s20, 0
      %s23 = sadd.s32 %s22, 1
      %s24 = scalar_select %p21, %s22, %s23
      %p27 = pneg %p21
      %p28 = scmp.eq.s32.totalorder %s12, 2
      %p29 = por %p27, %p28
      %p30 = scmp.ne.s32.totalorder %s22, %s25
      %p31 = scmp.eq.s32.totalorder %s12, 0
      %p32 = por %p30, %p31
      %p33 = scmp.ne.s32.totalorder %s22, %s25
      %p34 = scmp.eq.s32.totalorder %s17, 2
      %p35 = por %p33, %p34
      %p36 = scmp.ne.s32.totalorder %s25, %s26
      %p37 = scmp.eq.s32.totalorder %s17, 0
      %p38 = por %p36, %p37
      %p39 = scmp.ne.s32.totalorder %s25, %s26
      %p40 = scmp.eq.s32.totalorder %s18, 2
      %p41 = por %p39, %p40
      %p43 = scmp.ne.s32.totalorder %s26, %s42
      %p44 = scmp.eq.s32.totalorder %s18, 0
      %p45 = por %p43, %p44
      %s47 = sadd.s32 %s46, 1
      %p50 = scmp.eq.s32.totalorder %s12, 2
      %p51 = scmp.ne.s32.totalorder %s46, %s48
      %p52 = scmp.eq.s32.totalorder %s12, 0
      %p53 = por %p51, %p52
      %p54 = scmp.ne.s32.totalorder %s46, %s48
      %p55 = scmp.eq.s32.totalorder %s17, 2
      %p56 = por %p54, %p55
      %p57 = scmp.ne.s32.totalorder %s48, %s49
      %p58 = scmp.eq.s32.totalorder %s17, 0
      %p59 = por %p57, %p58
      %p60 = scmp.ne.s32.totalorder %s48, %s49
      %p61 = scmp.eq.s32.totalorder %s18, 2
      %p62 = por %p60, %p61
      %p64 = scmp.ne.s32.totalorder %s49, %s63
      %p65 = scmp.eq.s32.totalorder %s18, 0
      %p66 = por %p64, %p65
      %s68 = sadd.s32 %s67, 1
      %p71 = scmp.eq.s32.totalorder %s12, 2
      %p72 = scmp.ne.s32.totalorder %s67, %s69
      %p73 = scmp.eq.s32.totalorder %s12, 0
      %p74 = por %p72, %p73
      %p75 = scmp.ne.s32.totalorder %s67, %s69
      %p76 = scmp.eq.s32.totalorder %s17, 2
      %p77 = por %p75, %p76
      %p78 = scmp.ne.s32.totalorder %s69, %s70
      %p79 = scmp.eq.s32.totalorder %s17, 0
      %p80 = por %p78, %p79
      %p81 = scmp.ne.s32.totalorder %s69, %s70
      %p82 = scmp.eq.s32.totalorder %s18, 2
      %p83 = por %p81, %p82
      %p85 = scmp.ne.s32.totalorder %s70, %s84
      %p86 = scmp.eq.s32.totalorder %s18, 0
      %p87 = por %p85, %p86
      %s88 = ssub.s32 %s12, %s19
      %p89 = scmp.eq.s32.totalorder %s88, 0
      %s91 = sadd.s32 %s90, 1
      %s92 = scalar_select %p89, %s90, %s91
      %p95 = pneg %p89
      %p96 = scmp.eq.s32.totalorder %s12, 2
      %p97 = por %p95, %p96
      %p98 = scmp.ne.s32.totalorder %s90, %s93
      %p99 = scmp.eq.s32.totalorder %s12, 0
      %p100 = por %p98, %p99
      %p101 = scmp.ne.s32.totalorder %s90, %s93
      %p102 = scmp.eq.s32.totalorder %s17, 2
      %p103 = por %p101, %p102
      %p104 = scmp.ne.s32.totalorder %s93, %s94
      %p105 = scmp.eq.s32.totalorder %s17, 0
      %p106 = por %p104, %p105
      %p107 = scmp.ne.s32.totalorder %s93, %s94
      %p108 = scmp.eq.s32.totalorder %s18, 2
      %p109 = por %p107, %p108
      %p111 = scmp.ne.s32.totalorder %s94, %s110
      %p112 = scmp.eq.s32.totalorder %s18, 0
      %p113 = por %p111, %p112
      %p114 = scmp.le.s32.totalorder 1, %s12
      %p115 = scmp.lt.s32.totalorder %s12, 4
      %p116 = pnand %p114, %p115
      %p117 = pneg %p116
      // Predicated region
      $region9: #{tpu_custom_call.1} parent=5 // pred_check
        _
      $region10: #{tpu_custom_call.1} parent=5 // pred_check_branch
        %119 = sbr.rel (%p116) target = $region12
      $region11: #{tpu_custom_call.1} parent=5 // pred_region
        %s120 = ssub.s32 %s12, 1
        // Predicated region
        $region13: #{tpu_custom_call.1} parent=11 // pred_check
          %p121 = pneg %p59
        $region14: #{tpu_custom_call.1} parent=11 // pred_check_branch
          %123 = sbr.rel (%p121) target = $region16
        $region15: #{tpu_custom_call.1} parent=11 // pred_region
          _
        $region16: #{tpu_custom_call.1} parent=11 // pred_fallthru
          _
        // Predicated region
        $region17: #{tpu_custom_call.1} parent=11 // pred_check
          %p124 = pneg %p80
        $region18: #{tpu_custom_call.1} parent=11 // pred_check_branch
          %126 = sbr.rel (%p124) target = $region20
        $region19: #{tpu_custom_call.1} parent=11 // pred_region
          _
        $region20: #{tpu_custom_call.1} parent=11 // pred_fallthru
          _
      $region12: #{tpu_custom_call.1} parent=5 // pred_fallthru
        _
      %p127 = scmp.lt.s32.totalorder %s12, 3
      // Predicated region
      $region21: #{tpu_custom_call.1} parent=5 // pred_check
        %p128 = pneg %p127
      $region22: #{tpu_custom_call.1} parent=5 // pred_check_branch
        %130 = sbr.rel (%p128) target = $region24
      $region23: #{tpu_custom_call.1} parent=5 // pred_region
        // Predicated region
        $region25: #{tpu_custom_call.1} parent=23 // pred_check
          %p131 = pneg %p32
        $region26: #{tpu_custom_call.1} parent=23 // pred_check_branch
          %133 = sbr.rel (%p131) target = $region28
        $region27: #{tpu_custom_call.1} parent=23 // pred_region
          %s134 = smul.u32 16, %s12
          %s135 = ssub.s32 38, %s134
          %p136 = scmp.lt.s32.totalorder %s135, 16
          %s137 = scalar_select %p136, %s135, 16
          %s138 = smul.u32 128, %s137
          %p139 = scmp.lt.s32.totalorder %s134, 37
          %s140 = scalar_select %p139, %s134, 37
          %s141 = smul.addr %s140, 8
          %s142 = scalar_lea.vmem %s0, %s141
          %s143 = smul.u32 16, %s12
          %s144 = ssub.s32 38, %s143
          %p145 = scmp.lt.s32.totalorder %s144, 16
          %s146 = scalar_select %p145, %s144, 16
          %s147 = smul.u32 128, %s146
        $region28: #{tpu_custom_call.1} parent=23 // pred_fallthru
          _
      $region24: #{tpu_custom_call.1} parent=5 // pred_fallthru
        _
      %p148 = scmp.le.s32.totalorder 1, %s12
      %p149 = scmp.lt.s32.totalorder %s12, 4
      %p150 = pnand %p148, %p149
      %p151 = pneg %p150
      // Predicated region
      $region29: #{tpu_custom_call.1} parent=5 // pred_check
        _
      $region30: #{tpu_custom_call.1} parent=5 // pred_check_branch
        %153 = sbr.rel (%p150) target = $region32
      $region31: #{tpu_custom_call.1} parent=5 // pred_region
        %s154 = ssub.s32 %s12, 1
        %s155 = smul.u32 16, %s17
        %s156 = ssub.s32 38, %s155
        %p157 = scmp.lt.s32.totalorder %s156, 16
        %s158 = scalar_select %p157, %s156, 16
        %s159 = smul.u32 128, %s158
        %p160 = scmp.lt.s32.totalorder %s155, 37
        %s161 = scalar_select %p160, %s155, 37
        %s162 = smul.addr %s161, 8
        %s163 = scalar_lea.vmem %s0, %s162
        %p164 = pneg %p38
        %p165 = pneg %p35
        %p166 = pneg %p59
        %p167 = pneg %p56
        %p168 = pneg %p80
        %p169 = pneg %p77
        %p170 = pneg %p106
        %p171 = pneg %p103
        %s172 = sand.u32 %s93, 1
        %s173 = scalar_lea.sflag [#allocation3], %s172
        %s174 = sand.u32 %s93, 1
        %s175 = smul.addr %s174, 2
        %s176 = scalar_lea.vmem [#allocation2], %s175
        %s177 = smul.u32 16, %s17
        %s178 = ssub.s32 38, %s177
        %p179 = scmp.lt.s32.totalorder %s178, 16
        %s180 = scalar_select %p179, %s178, 16
        %s181 = smul.u32 128, %s180
        %p182 = scmp.lt.s32.totalorder %s177, 37
        %s183 = scalar_select %p182, %s177, 37
        %s184 = smul.addr %s183, 8
        %s185 = scalar_lea.vmem %s0, %s184
        %s186 = smul.u32 16, %s17
        %s187 = ssub.s32 38, %s186
        %p188 = scmp.lt.s32.totalorder %s187, 16
        %s189 = scalar_select %p188, %s187, 16
        %s190 = smul.u32 128, %s189
        %v191 = vld [vmem:[%s1] sm:$0x3]
        %v192 = vld [vmem:[%s185] sm:$0xff]
        %v193 = vld [vmem:[%s185 + $0x8] sm:$0xff]
        %v194 = vld [vmem:[%s185 + $0x10] sm:$0xff]
        %v195 = vld [vmem:[%s185 + $0x18] sm:$0xff]
        %v196 = vld [vmem:[%s185 + $0x20] sm:$0xff]
        %v197 = vld [vmem:[%s185 + $0x28] sm:$0xff]
        %v198 = vld [vmem:[%s185 + $0x30] sm:$0xff]
        %v199 = vld [vmem:[%s185 + $0x38] sm:$0xff]
        %v200 = vld [vmem:[%s185 + $0x40] sm:$0xff]
        %v201 = vld [vmem:[%s185 + $0x48] sm:$0xff]
        %v202 = vld [vmem:[%s185 + $0x50] sm:$0xff]
        %v203 = vld [vmem:[%s185 + $0x58] sm:$0xff]
        %v204 = vld [vmem:[%s185 + $0x60] sm:$0xff]
        %v205 = vld [vmem:[%s185 + $0x68] sm:$0xff]
        %v206 = vld [vmem:[%s185 + $0x70] sm:$0xff]
        %v207 = vld [vmem:[%s185 + $0x78] sm:$0xff]
        %v208 = vld [vmem:[%s2] sm:$0x3]
        %210 = vset.pattern.permute.xlu0 0
        %211 = vperm.xlu0 %210, %v208
        %v212 = vpop.permute.xlu0 %211
        %vm214 = vcmask 130048
        %v216 = vsel %vm214, %v191, 0
        %v219 = vsel %vm214, %v192, 0
        %v222 = vsel %vm214, %v193, 0
        %v225 = vsel %vm214, %v194, 0
        %v228 = vsel %vm214, %v195, 0
        %v231 = vsel %vm214, %v196, 0
        %v234 = vsel %vm214, %v197, 0
        %v237 = vsel %vm214, %v198, 0
        %v240 = vsel %vm214, %v199, 0
        %v243 = vsel %vm214, %v200, 0
        %v246 = vsel %vm214, %v201, 0
        %v249 = vsel %vm214, %v202, 0
        %v252 = vsel %vm214, %v203, 0
        %v255 = vsel %vm214, %v204, 0
        %v258 = vsel %vm214, %v205, 0
        %v261 = vsel %vm214, %v206, 0
        %v264 = vsel %vm214, %v207, 0
        %266 = vmatprep.subr.mxu0 0.0
        %267 = vmatpush1.xpose.msra.mxu0 %v264
        %268 = vmatprep.subr.mxu0 0.0
        %269 = vmatpush1.xpose.msra.mxu0 %v261
        %270 = vmatprep.subr.mxu0 0.0
        %271 = vmatpush1.xpose.msra.mxu0 %v258
        %272 = vmatprep.subr.mxu0 0.0
        %273 = vmatpush1.xpose.msra.mxu0 %v255
        %274 = vmatprep.subr.mxu0 0.0
        %275 = vmatpush1.xpose.msra.mxu0 %v252
        %276 = vmatprep.subr.mxu0 0.0
        %277 = vmatpush1.xpose.msra.mxu0 %v249
        %278 = vmatprep.subr.mxu0 0.0
        %279 = vmatpush1.xpose.msra.mxu0 %v246
        %280 = vmatprep.subr.mxu0 0.0
        %281 = vmatpush1.xpose.msra.mxu0 %v243
        %282 = vmatprep.subr.mxu0 0.0
        %283 = vmatpush1.xpose.msra.mxu0 %v240
        %284 = vmatprep.subr.mxu0 0.0
        %285 = vmatpush1.xpose.msra.mxu0 %v237
        %286 = vmatprep.subr.mxu0 0.0
        %287 = vmatpush1.xpose.msra.mxu0 %v234
        %288 = vmatprep.subr.mxu0 0.0
        %289 = vmatpush1.xpose.msra.mxu0 %v231
        %290 = vmatprep.subr.mxu0 0.0
        %291 = vmatpush1.xpose.msra.mxu0 %v228
        %292 = vmatprep.subr.mxu0 0.0
        %293 = vmatpush1.xpose.msra.mxu0 %v225
        %294 = vmatprep.subr.mxu0 0.0
        %295 = vmatpush1.xpose.msra.mxu0 %v222
        %296 = vmatprep.subr.mxu0 0.0
        %297 = vmatpush1.xpose.msra.mxu0 %v219
        %298 = vmatprep.subr.mxu0 0.0
        %299 = vmatpush2.xpose.msra.mxu0 0.0
        %300 = vmatprep.subr.mxu0 0.0
        %301 = vmatpush2.xpose.msra.mxu0 0.0
        %302 = vmatprep.subr.mxu0 0.0
        %303 = vmatpush2.xpose.msra.mxu0 0.0
        %304 = vmatprep.subr.mxu0 0.0
        %305 = vmatpush2.xpose.msra.mxu0 0.0
        %306 = vmatprep.subr.mxu0 0.0
        %307 = vmatpush2.xpose.msra.mxu0 0.0
        %308 = vmatprep.subr.mxu0 0.0
        %309 = vmatpush2.xpose.msra.mxu0 0.0
        %310 = vmatprep.subr.mxu0 0.0
        %311 = vmatpush2.xpose.msra.mxu0 0.0
        %312 = vmatprep.subr.mxu0 0.0
        %313 = vmatpush2.xpose.msra.mxu0 0.0
        %314 = vmatprep.subr.mxu0 0.0
        %315 = vmatpush2.xpose.msra.mxu0 0.0
        %316 = vmatprep.subr.mxu0 0.0
        %317 = vmatpush2.xpose.msra.mxu0 0.0
        %318 = vmatprep.subr.mxu0 0.0
        %319 = vmatpush2.xpose.msra.mxu0 0.0
        %320 = vmatprep.subr.mxu0 0.0
        %321 = vmatpush2.xpose.msra.mxu0 0.0
        %322 = vmatprep.subr.mxu0 0.0
        %323 = vmatpush2.xpose.msra.mxu0 0.0
        %324 = vmatprep.subr.mxu0 0.0
        %325 = vmatpush2.xpose.msra.mxu0 0.0
        %326 = vmatprep.subr.mxu0 0.0
        %327 = vmatpush2.xpose.msra.mxu0 0.0
        %328 = vmatprep.subr.mxu0 0.0
        %329 = vmatpush2.xpose.msra.mxu0 0.0
        %330 = vmatprep.mubr.f32.mxu0 0.0
        %331 = vmatmul.mubr.f32.gmra.mxu0 %v216
        %v332 = vpop.f32.mrf.mxu0
        %v333 = vadd.f32 %v212, %v332
        %v334 = vpop.f32.mrf.mxu0
        %335 = vdwg.mxu0
        %336 = vst [vmem:[%s176] sm:$0x3] %v333
        %s337 = sand.u32 %s93, 1
        %s338 = scalar_lea.sflag [#allocation3], %s337
        %s339 = sand.u32 %s93, 1
        %s340 = smul.addr %s339, 2
        %s341 = scalar_lea.vmem [#allocation2], %s340
        // Predicated region
        $region33: #{tpu_custom_call.1} parent=31 // pred_check
          %p342 = pneg %p103
        $region34: #{tpu_custom_call.1} parent=31 // pred_check_branch
          %344 = sbr.rel (%p342) target = $region36
        $region35: #{tpu_custom_call.1} parent=31 // pred_region
          %s346 = ssub.s32 32, 32
          %347 = vsyncadd %s338, %s346
          %s348 = smul.addr %s17, 32
          %s349 = scalar_lea.hbm %s3, %s348
          %s351 = sshll.u32 %s341, 4
          %s352 = int_to_ptr.vmem [resolvable:$true] %s351
          %354 = dma.vmem_to_hbm [thread:$0]  %s352, 32, %s349, %s338
        $region36: #{tpu_custom_call.1} parent=31 // pred_fallthru
          _
      $region32: #{tpu_custom_call.1} parent=5 // pred_fallthru
        _
      %p355 = scmp.le.s32.totalorder 2, %s12
      // Predicated region
      $region37: #{tpu_custom_call.1} parent=5 // pred_check
        %p356 = pneg %p355
      $region38: #{tpu_custom_call.1} parent=5 // pred_check_branch
        %358 = sbr.rel (%p356) target = $region40
      $region39: #{tpu_custom_call.1} parent=5 // pred_region
        %s359 = ssub.s32 %s12, 2
        // Predicated region
        $region41: #{tpu_custom_call.1} parent=39 // pred_check
          %p360 = pneg %p109
        $region42: #{tpu_custom_call.1} parent=39 // pred_check_branch
          %362 = sbr.rel (%p360) target = $region44
        $region43: #{tpu_custom_call.1} parent=39 // pred_region
          %s363 = sand.u32 %s94, 1
          %s364 = scalar_lea.sflag [#allocation3], %s363
          %s365 = sand.u32 %s94, 1
          %s366 = smul.addr %s365, 2
          %s367 = scalar_lea.vmem [#allocation2], %s366
          %368 = dma.done %s364, 32
        $region44: #{tpu_custom_call.1} parent=39 // pred_fallthru
          _
      $region40: #{tpu_custom_call.1} parent=5 // pred_fallthru
        _
    $region6: #{tpu_custom_call.1} parent=1 // loop_footer
      %s16 = sadd.s32 1, %s12
    $region7: #{tpu_custom_call.1} parent=1 // loop_footer_branch
      %11 = sbr.rel target = $region3
    $region8: #{tpu_custom_call.1} parent=1 // loop_exit
      _
    %369 = vsyncpa [#allocation3], 1
    %s370 = scalar_lea.sflag [#allocation3], 1
    %371 = vsyncpa %s370, 1

</llo_original>
